<compile_context>
chip_gen: v7x
topology: tpu7x:2x2x1
jax: 0.10.0
libtpu: 0.0.40
codegen_flags: <defaults>
</compile_context>

<pallas_src>
import functools

import jax
import jax.numpy as jnp
from jax.experimental import pallas as pl
from jax.experimental.pallas import tpu as pltpu

LANE = 128            # lane width (last dim padding of all hidden features)
SUBLANE = 8           # sublane width (second-to-last dim alignment)
MAX_BATCH_TILE = 1024  # per-grid-step batch rows (amortizes ~0.35us/step)


def _round_up(x, m):
    return (x + m - 1) // m * m


def _cdiv(a, b):
    return (a + b - 1) // b


# -----------------------------------------------------------------------------
# Fused MLP kernel.
#   x_ref: [TB, DIN_P]            f32  (real obs features, sublane-padded only)
#   w_ref: [DPAD, L*DPAD]         bf16 (zero-padded weight slab)
#   b_ref: [1, L*DPAD]            f32  (zero-padded bias slab)
#   o_ref: [TB, DPAD]             f32  (only [:, :out_dim] is meaningful)
# -----------------------------------------------------------------------------
def _fused_mlp_kernel(x_ref, w_ref, b_ref, o_ref, *, n_layers, dpad, din_p):
    # Layer 0: contract over the real (sublane-padded) input features only.
    # Equivalent to zero-padding x to 128 lanes because padded W rows are 0.
    x = x_ref[...].astype(jnp.bfloat16)                     # [TB, DIN_P] bf16
    w0 = w_ref[:din_p, 0:dpad]                              # [DIN_P, DPAD] bf16
    acc = jnp.dot(x, w0, preferred_element_type=jnp.float32)   # MXU, f32 acc
    acc = acc + b_ref[:, 0:dpad]                            # [1, DPAD] broadcast

    for j in range(1, n_layers):                            # unrolled at trace
        h = jnp.tanh(acc).astype(jnp.bfloat16)              # EUP (f32 tanh; v5e-safe)
        w = w_ref[:, j * dpad:(j + 1) * dpad]               # [DPAD, DPAD], lane-aligned
        acc = jnp.dot(h, w, preferred_element_type=jnp.float32)
        acc = acc + b_ref[:, j * dpad:(j + 1) * dpad]

    o_ref[...] = acc.astype(o_ref.dtype)                    # lane-dense store (DPAD=128)


# -----------------------------------------------------------------------------
# Parameter init (torch.nn.Linear default U(-1/sqrt(fan_in), +1/sqrt(fan_in)))
# and packing into zero-padded contiguous slabs (weights in bf16).
# -----------------------------------------------------------------------------
def init_mlp_params(key, sizes):
    params = []
    for j in range(len(sizes) - 1):
        fan_in, fan_out = sizes[j], sizes[j + 1]
        key, kw, kb = jax.random.split(key, 3)
        bound = 1.0 / jnp.sqrt(fan_in)
        w = jax.random.uniform(kw, (fan_in, fan_out), jnp.float32, -bound, bound)
        b = jax.random.uniform(kb, (fan_out,), jnp.float32, -bound, bound)
        params.append((w, b))
    return params


def pack_params(params, dpad=LANE):
    """Pack per-layer (W [din,dout], b [dout]) into zero-padded slabs.

    Returns (w_slab [dpad, L*dpad] bf16, b_slab [1, L*dpad] f32)."""
    n_layers = len(params)
    w_slab = jnp.zeros((dpad, n_layers * dpad), jnp.float32)
    b_slab = jnp.zeros((1, n_layers * dpad), jnp.float32)
    for j, (w, b) in enumerate(params):
        din, dout = w.shape
        assert din <= dpad and dout <= dpad, "feature dim exceeds lane padding"
        w_slab = w_slab.at[:din, j * dpad:j * dpad + dout].set(w)
        b_slab = b_slab.at[0, j * dpad:j * dpad + dout].set(b)
    return w_slab.astype(jnp.bfloat16), b_slab


# -----------------------------------------------------------------------------
# Forward pass.
# -----------------------------------------------------------------------------
def _forward_padded_impl(obs, w_slab, b_slab):
    batch, din = obs.shape
    dpad, total = w_slab.shape
    n_layers = total // dpad

    # Feature axis: sublane-pad only (no-op for obs_dim=16); never 128-lane pad
    # the activations in HBM.
    din_p = _round_up(din, SUBLANE)

    # Batch tiling: >=2 grid steps once the padded batch reaches 16 rows so the
    # "parallel" axis can feed both v7x TensorCores; tile capped at
    # MAX_BATCH_TILE; over-pad is < SUBLANE rows per tile (no round-up-to-tile).
    bp8 = _round_up(max(batch, 1), SUBLANE)
    n_tiles = _cdiv(bp8, MAX_BATCH_TILE)
    if bp8 >= 2 * SUBLANE:
        n_tiles = max(n_tiles, 2)
    tb = _round_up(_cdiv(bp8, n_tiles), SUBLANE)
    bp = tb * n_tiles

    pad_rows = bp - batch
    pad_cols = din_p - din
    if pad_rows or pad_cols:
        obs = jnp.pad(obs, ((0, pad_rows), (0, pad_cols)))

    kernel = functools.partial(
        _fused_mlp_kernel, n_layers=n_layers, dpad=dpad, din_p=din_p)

    out_pad = pl.pallas_call(
        kernel,
        out_shape=jax.ShapeDtypeStruct((bp, dpad), jnp.float32),
        grid=(n_tiles,),
        in_specs=[
            pl.BlockSpec((tb, din_p), lambda i: (i, 0)),                # activations
            pl.BlockSpec((dpad, n_layers * dpad), lambda i: (0, 0)),    # bf16 W slab
            pl.BlockSpec((1, n_layers * dpad), lambda i: (0, 0)),       # f32 b slab
        ],
        out_specs=pl.BlockSpec((tb, dpad), lambda i: (i, 0)),
        compiler_params=pltpu.CompilerParams(
            dimension_semantics=("parallel",)),   # shard batch tiles over TCs
    )(obs, w_slab, b_slab)
    return out_pad


@jax.jit
def mlp_network_forward_padded(obs, w_slab, b_slab):
    """Returns the (padded_batch, 128) buffer; only [:batch, :out_dim] is valid.

    Use this entry point when the consumer can slice lazily (avoids a
    standalone HBM slice copy)."""
    return _forward_padded_impl(obs, w_slab, b_slab)


@functools.partial(jax.jit, static_argnames=("out_dim",))
def mlp_network_forward(obs, w_slab, b_slab, *, out_dim):
    """Module-exact output shape (batch, out_dim)."""
    out_pad = _forward_padded_impl(obs, w_slab, b_slab)
    return out_pad[:obs.shape[0], :out_dim]


# -----------------------------------------------------------------------------
# Pure-JAX f32 reference on the unpadded params for correctness checking.
# -----------------------------------------------------------------------------
def mlp_network_reference(obs, params):
    x = obs
    n_layers = len(params)
    for j, (w, b) in enumerate(params):
        x = x @ w + b
        if j < n_layers - 1:
            x = jnp.tanh(x)
    return x


if __name__ == "__main__":
    # Small shapes consistent with the module: obs_dim=16, hid_sizes=(32, 32),
    # output dim fixed at 5 by MlpNetwork.__init__.
    obs_dim = 16
    hid_sizes = (32, 32)
    out_dim = 5
    batch = 8

    key = jax.random.PRNGKey(0)
    key, k_obs = jax.random.split(key)
    obs = jax.random.normal(k_obs, (batch, obs_dim), jnp.float32)

    sizes = [obs_dim] + list(hid_sizes) + [out_dim]
    params = init_mlp_params(key, sizes)
    w_slab, b_slab = pack_params(params)

    out = mlp_network_forward(obs, w_slab, b_slab, out_dim=out_dim)
    out = jax.block_until_ready(out)

    ref = mlp_network_reference(obs, params)
    assert out.shape == (batch, out_dim), out.shape
    # bf16 MXU operands: loosened tolerance vs the f32 reference.
    assert jnp.allclose(out, ref, atol=5e-2, rtol=5e-2), "mismatch vs reference"

    print("KERNEL_OK")
</pallas_src>

<mosaic_0001>
module attributes {stable_mosaic.version = 11 : i64} {
  func.func @_fused_mlp_kernel(%arg0: i32, %arg1: memref<8x16xf32, #tpu.memory_space<vmem>>, %arg2: memref<128x384xbf16, #tpu.memory_space<vmem>>, %arg3: memref<1x384xf32, #tpu.memory_space<vmem>>, %arg4: memref<8x128xf32, #tpu.memory_space<vmem>>) attributes {dimension_semantics = [#tpu.dimension_semantics<parallel>], iteration_bounds = array<i64: 1>, scalar_prefetch = 0 : i64, scratch_operands = 0 : i64, tpu.core_type = #tpu.core_type<tc>, window_params = [{transform_indices = @transform_0, window_bounds = array<i64: 8, 16>}, {pipeline_mode = #tpu.pipeline_mode<synchronous>, transform_indices = @transform_1, window_bounds = array<i64: 128, 384>}, {pipeline_mode = #tpu.pipeline_mode<synchronous>, transform_indices = @transform_2, window_bounds = array<i64: 1, 384>}, {transform_indices = @transform_3, window_bounds = array<i64: 8, 128>}]} {
    %c0 = arith.constant 0 : index
    %c0_0 = arith.constant 0 : index
    %0 = vector.load %arg1[%c0, %c0_0] : memref<8x16xf32, #tpu.memory_space<vmem>>, vector<8x16xf32>
    %1 = arith.truncf %0 : vector<8x16xf32> to vector<8x16xbf16>
    %c0_1 = arith.constant 0 : index
    %c0_2 = arith.constant 0 : index
    %2 = vector.load %arg2[%c0_1, %c0_2] : memref<128x384xbf16, #tpu.memory_space<vmem>>, vector<16x128xbf16>
    %cst = arith.constant dense<0.000000e+00> : vector<8x128xf32>
    %3 = tpu.matmul %1, %2, %cst {dimension_numbers = #tpu.dot_dimension_numbers<[1], [0], [0], [1], [0, 0, 1, 1], [], []>} : vector<8x16xbf16>, vector<16x128xbf16>, vector<8x128xf32> -> vector<8x128xf32>
    %c0_3 = arith.constant 0 : index
    %c0_4 = arith.constant 0 : index
    %4 = vector.load %arg3[%c0_3, %c0_4] : memref<1x384xf32, #tpu.memory_space<vmem>>, vector<1x128xf32>
    %5 = vector.broadcast %4 : vector<1x128xf32> to vector<8x128xf32>
    %6 = arith.addf %3, %5 : vector<8x128xf32>
    %7 = math.tanh %6 : vector<8x128xf32>
    %8 = arith.truncf %7 : vector<8x128xf32> to vector<8x128xbf16>
    %c0_5 = arith.constant 0 : index
    %c128 = arith.constant 128 : index
    %9 = vector.load %arg2[%c0_5, %c128] : memref<128x384xbf16, #tpu.memory_space<vmem>>, vector<128x128xbf16>
    %cst_6 = arith.constant dense<0.000000e+00> : vector<8x128xf32>
    %10 = tpu.matmul %8, %9, %cst_6 {dimension_numbers = #tpu.dot_dimension_numbers<[1], [0], [0], [1], [0, 0, 1, 1], [], []>} : vector<8x128xbf16>, vector<128x128xbf16>, vector<8x128xf32> -> vector<8x128xf32>
    %c0_7 = arith.constant 0 : index
    %c128_8 = arith.constant 128 : index
    %11 = vector.load %arg3[%c0_7, %c128_8] : memref<1x384xf32, #tpu.memory_space<vmem>>, vector<1x128xf32>
    %12 = vector.broadcast %11 : vector<1x128xf32> to vector<8x128xf32>
    %13 = arith.addf %10, %12 : vector<8x128xf32>
    %14 = math.tanh %13 : vector<8x128xf32>
    %15 = arith.truncf %14 : vector<8x128xf32> to vector<8x128xbf16>
    %c0_9 = arith.constant 0 : index
    %c256 = arith.constant 256 : index
    %16 = vector.load %arg2[%c0_9, %c256] : memref<128x384xbf16, #tpu.memory_space<vmem>>, vector<128x128xbf16>
    %cst_10 = arith.constant dense<0.000000e+00> : vector<8x128xf32>
    %17 = tpu.matmul %15, %16, %cst_10 {dimension_numbers = #tpu.dot_dimension_numbers<[1], [0], [0], [1], [0, 0, 1, 1], [], []>} : vector<8x128xbf16>, vector<128x128xbf16>, vector<8x128xf32> -> vector<8x128xf32>
    %c0_11 = arith.constant 0 : index
    %c256_12 = arith.constant 256 : index
    %18 = vector.load %arg3[%c0_11, %c256_12] : memref<1x384xf32, #tpu.memory_space<vmem>>, vector<1x128xf32>
    %19 = vector.broadcast %18 : vector<1x128xf32> to vector<8x128xf32>
    %20 = arith.addf %17, %19 : vector<8x128xf32>
    %c0_13 = arith.constant 0 : index
    %c0_14 = arith.constant 0 : index
    %21 = vector.load %arg4[%c0_13, %c0_14] : memref<8x128xf32, #tpu.memory_space<vmem>>, vector<8x128xf32>
    tpu.vector_store %arg4[%c0_13, %c0_14], %20 {strides = array<i32>} : memref<8x128xf32, #tpu.memory_space<vmem>>, vector<8x128xf32>,
    return
  }
  func.func @transform_0(%arg0: i32) -> (i32, i32) {
    %c0_i32 = arith.constant 0 : i32
    %c0_i32_0 = arith.constant 0 : i32
    return %arg0, %c0_i32 : i32, i32
  }
  func.func @transform_1(%arg0: i32) -> (i32, i32) {
    %c0_i32 = arith.constant 0 : i32
    %c0_i32_0 = arith.constant 0 : i32
    %c0_i32_1 = arith.constant 0 : i32
    return %c0_i32, %c0_i32_0 : i32, i32
  }
  func.func @transform_2(%arg0: i32) -> (i32, i32) {
    %c0_i32 = arith.constant 0 : i32
    %c0_i32_0 = arith.constant 0 : i32
    %c0_i32_1 = arith.constant 0 : i32
    return %c0_i32, %c0_i32_0 : i32, i32
  }
  func.func @transform_3(%arg0: i32) -> (i32, i32) {
    %c0_i32 = arith.constant 0 : i32
    %c0_i32_0 = arith.constant 0 : i32
    return %arg0, %c0_i32 : i32, i32
  }
}

</mosaic_0001>

<llo_original>
// kernel: mlp_network_forward.1
$region0: #{mlp_network_forward.1}
  #allocation0 [shape = 'u32[]', space=smem, size = 0x4, offset = 0x4, fixed_abs, tag = 'smem constant byte address 0x4 - core index']
  #allocation1 [shape = 'u32[144,128]{1,0:T(1,128)}', space=vmem, size = 0x12000, scoped, tag = 'internal scratch']
  %s0 = inlined_call_operand.hbm [shape: f32[8,16], index: 0, kind: input, shape index: {}]
  %s1 = inlined_call_operand.hbm [shape: bf16[128,384], index: 1, kind: input, shape index: {}]
  %s2 = inlined_call_operand.vmem [shape: f32[1,384], index: 2, kind: input, shape index: {}]
  %s3 = inlined_call_operand.hbm [shape: f32[8,128], index: 3, kind: output, shape index: {}]
  %s4 = sld [smem:[#allocation0]]
  $region30: #{mlp_network_forward.1} parent=0
    _
  %s6 = ssub.s32 1, %s4
  %s7 = scalar_select 0, %s6, %s4
  $region1: #{mlp_network_forward.1} parent=0
    #allocation2 [shape = 'u8[4096]{0}', space=vmem, size = 0x1000, scoped, tag = 'input window, operand 0, single buffered']
    #allocation3 [shape = 's32[1]{0}', space=sflag, size = 0x4, scoped, tag = 'scoped memory for mlp_network_forward.1']
    #allocation4 [shape = 's32[1]{0}', space=sflag, size = 0x4, scoped, tag = 'scoped memory for mlp_network_forward.1']
    #allocation5 [shape = 'u8[98304]{0}', space=vmem, size = 0x18000, scoped, tag = 'input window, operand 1, single buffered']
    #allocation6 [shape = 's32[1]{0}', space=sflag, size = 0x4, scoped, tag = 'scoped memory for mlp_network_forward.1']
    #allocation7 [shape = 'u8[4096]{0}', space=vmem, size = 0x1000, scoped, tag = 'output window, operand 0, single buffered']
    %8 = vsyncpa [#allocation3], 0
    %9 = vsyncpa [#allocation6], 0
    %10 = vsyncpa [#allocation4], 0
    // Predicated region
    $region2: #{mlp_network_forward.1} parent=1 // pred_check
      _
    $region3: #{mlp_network_forward.1} parent=1 // pred_check_branch
      %12 = sbr.rel (0) target = $region5
    $region4: #{mlp_network_forward.1} parent=1 // pred_region
      %s14 = ssub.s32 128, 128
      %15 = vsyncadd [#allocation3], %s14
      %s17 = sshll.u32 [#allocation2], 4
      %s18 = int_to_ptr.vmem [resolvable:$true] %s17
      %20 = dma.hbm_to_vmem [thread:$0]  %s0, 128, %s18, [#allocation3]
    $region5: #{mlp_network_forward.1} parent=1 // pred_fallthru
      _
    // Predicated region
    $region6: #{mlp_network_forward.1} parent=1 // pred_check
      _
    $region7: #{mlp_network_forward.1} parent=1 // pred_check_branch
      %22 = sbr.rel (0) target = $region9
    $region8: #{mlp_network_forward.1} parent=1 // pred_region
      %s24 = ssub.s32 3072, 3072
      %25 = vsyncadd [#allocation6], %s24
      %s26 = sshll.u32 [#allocation5], 4
      %s27 = int_to_ptr.vmem [resolvable:$true] %s26
      %32 = dma.hbm_to_vmem [thread:$0]  %s1, 3072, %s27, [#allocation6], 192, 192, 12
    $region9: #{mlp_network_forward.1} parent=1 // pred_fallthru
      _
    // Predicated region
    $region10: #{mlp_network_forward.1} parent=1 // pred_check
      _
    $region11: #{mlp_network_forward.1} parent=1 // pred_check_branch
      %34 = sbr.rel (0) target = $region13
    $region12: #{mlp_network_forward.1} parent=1 // pred_region
      _
    $region13: #{mlp_network_forward.1} parent=1 // pred_fallthru
      _
    // Predicated region
    $region14: #{mlp_network_forward.1} parent=1 // pred_check
      _
    $region15: #{mlp_network_forward.1} parent=1 // pred_check_branch
      %36 = sbr.rel (0) target = $region17
    $region16: #{mlp_network_forward.1} parent=1 // pred_region
      %37 = dma.done [#allocation3], 128
    $region17: #{mlp_network_forward.1} parent=1 // pred_fallthru
      _
    // Predicated region
    $region18: #{mlp_network_forward.1} parent=1 // pred_check
      _
    $region19: #{mlp_network_forward.1} parent=1 // pred_check_branch
      %39 = sbr.rel (0) target = $region21
    $region20: #{mlp_network_forward.1} parent=1 // pred_region
      %40 = dma.done [#allocation6], 3072
    $region21: #{mlp_network_forward.1} parent=1 // pred_fallthru
      _
    %v42 = vld [vmem:[#allocation2] sm:$0xff]
    %v43 = vpack.c.bf16 %v42, %v42
    %v44 = vld [vmem:[#allocation5] sm:$0xf]
    %v45 = vld [vmem:[#allocation5 + $0xc] sm:$0xf]
    %v46 = vld [vmem:[%s2] sm:$0x1]
    %v48 = vlaneseq
    %v49 = vshrl.u32 %v48, 7
    %v50 = vsub.s32 0, %v49
    %v51 = vrot.slane %v46, %v50
    %v55 = vunpack.c.l.b16 %v44
    %v56 = vunpack.c.l.b16 %v45
    %v57 = vpack.c.b16 %v56, %v55
    %vm59 = vcmask 130048
    %v61 = vsel %vm59, %v43, 0
    %63 = vmatprep.subr.bf16.mxu0 0
    %64 = vmatpush1.bf16.msra.mxu0 %v57
    %65 = vmatprep.subr.bf16.mxu0 0
    %66 = vmatpush1.bf16.msra.mxu0 0
    %67 = vmatprep.subr.bf16.mxu0 0
    %68 = vmatpush1.bf16.msra.mxu0 0
    %69 = vmatprep.subr.bf16.mxu0 0
    %70 = vmatpush1.bf16.msra.mxu0 0
    %71 = vmatprep.subr.bf16.mxu0 0
    %72 = vmatpush1.bf16.msra.mxu0 0
    %73 = vmatprep.subr.bf16.mxu0 0
    %74 = vmatpush1.bf16.msra.mxu0 0
    %75 = vmatprep.subr.bf16.mxu0 0
    %76 = vmatpush1.bf16.msra.mxu0 0
    %77 = vmatprep.subr.bf16.mxu0 0
    %78 = vmatpush1.bf16.msra.mxu0 0
    %79 = vmatprep.subr.bf16.mxu0 0
    %80 = vmatpush1.bf16.msra.mxu0 0
    %81 = vmatprep.subr.bf16.mxu0 0
    %82 = vmatpush1.bf16.msra.mxu0 0
    %83 = vmatprep.subr.bf16.mxu0 0
    %84 = vmatpush1.bf16.msra.mxu0 0
    %85 = vmatprep.subr.bf16.mxu0 0
    %86 = vmatpush1.bf16.msra.mxu0 0
    %87 = vmatprep.subr.bf16.mxu0 0
    %88 = vmatpush1.bf16.msra.mxu0 0
    %89 = vmatprep.subr.bf16.mxu0 0
    %90 = vmatpush1.bf16.msra.mxu0 0
    %91 = vmatprep.subr.bf16.mxu0 0
    %92 = vmatpush1.bf16.msra.mxu0 0
    %93 = vmatprep.subr.bf16.mxu0 0
    %94 = vmatpush1.bf16.msra.mxu0 0
    %95 = vmatprep.mubr.bf16.mxu0 0
    %96 = vmatmul.mubr.bf16.gmra.mrb[0].mxu0 %v61
    %v97 = vpop.f32.mrb[0].mxu0
    %v98 = vadd.f32 %v51, %v97
    %v99 = vpop.f32.mrb[0].mxu0
    %v100 = vpop.f32.mrb[0].mxu0
    %v101 = vpop.f32.mrb[0].mxu0
    %102 = vdwg.mxu0
    %v103 = vtanh.pop %v98
    %v104 = vpack.c.bf16 %v103, %v103
    %v105 = vld [vmem:[#allocation5 + $0x4] sm:$0xf]
    %v106 = vld [vmem:[#allocation5 + $0x10] sm:$0xf]
    %v107 = vld [vmem:[#allocation5 + $0x1c] sm:$0xf]
    %v108 = vld [vmem:[#allocation5 + $0x28] sm:$0xf]
    %v109 = vld [vmem:[#allocation5 + $0x34] sm:$0xf]
    %v110 = vld [vmem:[#allocation5 + $0x40] sm:$0xf]
    %v111 = vld [vmem:[#allocation5 + $0x4c] sm:$0xf]
    %v112 = vld [vmem:[#allocation5 + $0x58] sm:$0xf]
    %v113 = vld [vmem:[#allocation5 + $0x64] sm:$0xf]
    %v114 = vld [vmem:[#allocation5 + $0x70] sm:$0xf]
    %v115 = vld [vmem:[#allocation5 + $0x7c] sm:$0xf]
    %v116 = vld [vmem:[#allocation5 + $0x88] sm:$0xf]
    %v117 = vld [vmem:[#allocation5 + $0x94] sm:$0xf]
    %v118 = vld [vmem:[#allocation5 + $0xa0] sm:$0xf]
    %v119 = vld [vmem:[#allocation5 + $0xac] sm:$0xf]
    %v120 = vld [vmem:[#allocation5 + $0xb8] sm:$0xf]
    %v121 = vld [vmem:[%s2 + $0x1] sm:$0x1]
    %v123 = vlaneseq
    %v124 = vshrl.u32 %v123, 7
    %v125 = vsub.s32 0, %v124
    %v126 = vrot.slane %v121, %v125
    %v144 = vunpack.c.l.b16 %v105
    %v145 = vunpack.c.l.b16 %v106
    %v146 = vunpack.c.l.b16 %v107
    %v147 = vunpack.c.l.b16 %v108
    %v148 = vunpack.c.l.b16 %v109
    %v149 = vunpack.c.l.b16 %v110
    %v150 = vunpack.c.l.b16 %v111
    %v151 = vunpack.c.l.b16 %v112
    %v152 = vunpack.c.l.b16 %v113
    %v153 = vunpack.c.l.b16 %v114
    %v154 = vunpack.c.l.b16 %v115
    %v155 = vunpack.c.l.b16 %v116
    %v156 = vunpack.c.l.b16 %v117
    %v157 = vunpack.c.l.b16 %v118
    %v158 = vunpack.c.l.b16 %v119
    %v159 = vunpack.c.l.b16 %v120
    %v160 = vpack.c.b16 %v145, %v144
    %v161 = vpack.c.b16 %v147, %v146
    %v162 = vpack.c.b16 %v149, %v148
    %v163 = vpack.c.b16 %v151, %v150
    %v164 = vpack.c.b16 %v153, %v152
    %v165 = vpack.c.b16 %v155, %v154
    %v166 = vpack.c.b16 %v157, %v156
    %v167 = vpack.c.b16 %v159, %v158
    %176 = vmatprep.subr.bf16.mxu0 0
    %177 = vmatpush1.bf16.msra.mxu0 %v160
    %178 = vmatprep.subr.bf16.mxu0 0
    %179 = vmatpush1.bf16.msra.mxu0 %v161
    %180 = vmatprep.subr.bf16.mxu0 0
    %181 = vmatpush1.bf16.msra.mxu0 %v162
    %182 = vmatprep.subr.bf16.mxu0 0
    %183 = vmatpush1.bf16.msra.mxu0 %v163
    %184 = vmatprep.subr.bf16.mxu0 0
    %185 = vmatpush1.bf16.msra.mxu0 %v164
    %186 = vmatprep.subr.bf16.mxu0 0
    %187 = vmatpush1.bf16.msra.mxu0 %v165
    %188 = vmatprep.subr.bf16.mxu0 0
    %189 = vmatpush1.bf16.msra.mxu0 %v166
    %190 = vmatprep.subr.bf16.mxu0 0
    %191 = vmatpush1.bf16.msra.mxu0 %v167
    %192 = vmatprep.subr.bf16.mxu0 0
    %193 = vmatpush1.bf16.msra.mxu0 0
    %194 = vmatprep.subr.bf16.mxu0 0
    %195 = vmatpush1.bf16.msra.mxu0 0
    %196 = vmatprep.subr.bf16.mxu0 0
    %197 = vmatpush1.bf16.msra.mxu0 0
    %198 = vmatprep.subr.bf16.mxu0 0
    %199 = vmatpush1.bf16.msra.mxu0 0
    %200 = vmatprep.subr.bf16.mxu0 0
    %201 = vmatpush1.bf16.msra.mxu0 0
    %202 = vmatprep.subr.bf16.mxu0 0
    %203 = vmatpush1.bf16.msra.mxu0 0
    %204 = vmatprep.subr.bf16.mxu0 0
    %205 = vmatpush1.bf16.msra.mxu0 0
    %206 = vmatprep.subr.bf16.mxu0 0
    %207 = vmatpush1.bf16.msra.mxu0 0
    %208 = vmatprep.mubr.bf16.mxu0 0
    %209 = vmatmul.mubr.bf16.gmra.mrb[0].mxu0 %v104
    %v210 = vpop.f32.mrb[0].mxu0
    %v211 = vadd.f32 %v126, %v210
    %v212 = vpop.f32.mrb[0].mxu0
    %v213 = vpop.f32.mrb[0].mxu0
    %v214 = vpop.f32.mrb[0].mxu0
    %215 = vdwg.mxu0
    %v216 = vtanh.pop %v211
    %v217 = vpack.c.bf16 %v216, %v216
    %v218 = vld [vmem:[#allocation5 + $0x8] sm:$0xf]
    %v219 = vld [vmem:[#allocation5 + $0x14] sm:$0xf]
    %v220 = vld [vmem:[#allocation5 + $0x20] sm:$0xf]
    %v221 = vld [vmem:[#allocation5 + $0x2c] sm:$0xf]
    %v222 = vld [vmem:[#allocation5 + $0x38] sm:$0xf]
    %v223 = vld [vmem:[#allocation5 + $0x44] sm:$0xf]
    %v224 = vld [vmem:[#allocation5 + $0x50] sm:$0xf]
    %v225 = vld [vmem:[#allocation5 + $0x5c] sm:$0xf]
    %v226 = vld [vmem:[#allocation5 + $0x68] sm:$0xf]
    %v227 = vld [vmem:[#allocation5 + $0x74] sm:$0xf]
    %v228 = vld [vmem:[#allocation5 + $0x80] sm:$0xf]
    %v229 = vld [vmem:[#allocation5 + $0x8c] sm:$0xf]
    %v230 = vld [vmem:[#allocation5 + $0x98] sm:$0xf]
    %v231 = vld [vmem:[#allocation5 + $0xa4] sm:$0xf]
    %v232 = vld [vmem:[#allocation5 + $0xb0] sm:$0xf]
    %v233 = vld [vmem:[#allocation5 + $0xbc] sm:$0xf]
    %v234 = vld [vmem:[%s2 + $0x2] sm:$0x1]
    %v236 = vlaneseq
    %v237 = vshrl.u32 %v236, 7
    %v238 = vsub.s32 0, %v237
    %v239 = vrot.slane %v234, %v238
    %v257 = vunpack.c.l.b16 %v218
    %v258 = vunpack.c.l.b16 %v219
    %v259 = vunpack.c.l.b16 %v220
    %v260 = vunpack.c.l.b16 %v221
    %v261 = vunpack.c.l.b16 %v222
    %v262 = vunpack.c.l.b16 %v223
    %v263 = vunpack.c.l.b16 %v224
    %v264 = vunpack.c.l.b16 %v225
    %v265 = vunpack.c.l.b16 %v226
    %v266 = vunpack.c.l.b16 %v227
    %v267 = vunpack.c.l.b16 %v228
    %v268 = vunpack.c.l.b16 %v229
    %v269 = vunpack.c.l.b16 %v230
    %v270 = vunpack.c.l.b16 %v231
    %v271 = vunpack.c.l.b16 %v232
    %v272 = vunpack.c.l.b16 %v233
    %v273 = vpack.c.b16 %v258, %v257
    %v274 = vpack.c.b16 %v260, %v259
    %v275 = vpack.c.b16 %v262, %v261
    %v276 = vpack.c.b16 %v264, %v263
    %v277 = vpack.c.b16 %v266, %v265
    %v278 = vpack.c.b16 %v268, %v267
    %v279 = vpack.c.b16 %v270, %v269
    %v280 = vpack.c.b16 %v272, %v271
    %289 = vmatprep.subr.bf16.mxu0 0
    %290 = vmatpush1.bf16.msra.mxu0 %v273
    %291 = vmatprep.subr.bf16.mxu0 0
    %292 = vmatpush1.bf16.msra.mxu0 %v274
    %293 = vmatprep.subr.bf16.mxu0 0
    %294 = vmatpush1.bf16.msra.mxu0 %v275
    %295 = vmatprep.subr.bf16.mxu0 0
    %296 = vmatpush1.bf16.msra.mxu0 %v276
    %297 = vmatprep.subr.bf16.mxu0 0
    %298 = vmatpush1.bf16.msra.mxu0 %v277
    %299 = vmatprep.subr.bf16.mxu0 0
    %300 = vmatpush1.bf16.msra.mxu0 %v278
    %301 = vmatprep.subr.bf16.mxu0 0
    %302 = vmatpush1.bf16.msra.mxu0 %v279
    %303 = vmatprep.subr.bf16.mxu0 0
    %304 = vmatpush1.bf16.msra.mxu0 %v280
    %305 = vmatprep.subr.bf16.mxu0 0
    %306 = vmatpush1.bf16.msra.mxu0 0
    %307 = vmatprep.subr.bf16.mxu0 0
    %308 = vmatpush1.bf16.msra.mxu0 0
    %309 = vmatprep.subr.bf16.mxu0 0
    %310 = vmatpush1.bf16.msra.mxu0 0
    %311 = vmatprep.subr.bf16.mxu0 0
    %312 = vmatpush1.bf16.msra.mxu0 0
    %313 = vmatprep.subr.bf16.mxu0 0
    %314 = vmatpush1.bf16.msra.mxu0 0
    %315 = vmatprep.subr.bf16.mxu0 0
    %316 = vmatpush1.bf16.msra.mxu0 0
    %317 = vmatprep.subr.bf16.mxu0 0
    %318 = vmatpush1.bf16.msra.mxu0 0
    %319 = vmatprep.subr.bf16.mxu0 0
    %320 = vmatpush1.bf16.msra.mxu0 0
    %321 = vmatprep.mubr.bf16.mxu0 0
    %322 = vmatmul.mubr.bf16.gmra.mrb[0].mxu0 %v217
    %v323 = vpop.f32.mrb[0].mxu0
    %v324 = vadd.f32 %v239, %v323
    %v325 = vpop.f32.mrb[0].mxu0
    %v326 = vpop.f32.mrb[0].mxu0
    %v327 = vpop.f32.mrb[0].mxu0
    %328 = vdwg.mxu0
    %329 = vst [vmem:[#allocation7] sm:$0xff] %v324
    // Predicated region
    $region22: #{mlp_network_forward.1} parent=1 // pred_check
      _
    $region23: #{mlp_network_forward.1} parent=1 // pred_check_branch
      %331 = sbr.rel (0) target = $region25
    $region24: #{mlp_network_forward.1} parent=1 // pred_region
      %s333 = ssub.s32 128, 128
      %334 = vsyncadd [#allocation4], %s333
      %s336 = sshll.u32 [#allocation7], 4
      %s337 = int_to_ptr.vmem [resolvable:$true] %s336
      %339 = dma.vmem_to_hbm [thread:$0]  %s337, 128, %s3, [#allocation4]
    $region25: #{mlp_network_forward.1} parent=1 // pred_fallthru
      _
    // Predicated region
    $region26: #{mlp_network_forward.1} parent=1 // pred_check
      _
    $region27: #{mlp_network_forward.1} parent=1 // pred_check_branch
      %341 = sbr.rel (0) target = $region29
    $region28: #{mlp_network_forward.1} parent=1 // pred_region
      %342 = dma.done [#allocation4], 128
    $region29: #{mlp_network_forward.1} parent=1 // pred_fallthru
      _
    %343 = vsyncpa [#allocation3], 1
    %344 = vsyncpa [#allocation6], 1
    %345 = vsyncpa [#allocation4], 1

</llo_original>
